<compile_context>
chip_gen: v7x
topology: tpu7x:2x2x1
jax: 0.10.0
libtpu: 0.0.40
codegen_flags: <defaults>
</compile_context>

<pallas_src>
import functools
import math

import jax
import jax.numpy as jnp
from jax import lax
from jax.experimental import pallas as pl
from jax.experimental.pallas import tpu as pltpu


def _hw_budgets():
    """(per-x-tile byte budget, vmem_limit_bytes), generation-aware."""
    tile_bytes = 8 * 1024 * 1024          # 2x double-buffered in+out = 32 MiB
    vmem_limit = 48 * 1024 * 1024         # safe under v7x's 64 MiB physical
    try:
        vmem = int(pltpu.get_tpu_info().vmem_capacity_bytes)
        if vmem >= (96 << 20):            # v5e / v6e: 128 MiB physical VMEM
            vmem_limit = 100 * 1024 * 1024
    except Exception:
        pass                              # conservative defaults work everywhere
    return tile_bytes, vmem_limit


def _round_up(x, m):
    return (x + m - 1) // m * m


def _choose_fold(C, HW, itemsize):
    """Fold factor F so C*F fills the packed sublanes for this dtype, HW % F == 0."""
    pack = 8 * max(1, 4 // max(1, itemsize))   # 8 (f32) / 16 (bf16) / 32 (int8)
    if C % pack == 0:
        return 1
    F = pack // math.gcd(C, pack)
    return F if HW % F == 0 else 1


def _choose_lane_tile(CF, HWF, itemsize, budget):
    """Lane tile T: multiple of 128 (cdiv grid, masked tail) under the budget."""
    if HWF <= 128:
        return HWF                         # full (and only) lane extent
    max_lanes = max(128, (budget // (CF * itemsize)) // 128 * 128)
    return min(_round_up(HWF, 128), max_lanes)


def _choose_batch_tile(N, CF, T, itemsize, budget):
    """Largest divisor of N such that the (Nb, CF, T) block fits the budget."""
    for nb in range(N, 0, -1):
        if N % nb == 0 and nb * CF * T * itemsize <= budget:
            return nb
    return 1


def _channel_sum_kernel(x_ref, psum_ref, *, t_tile, lp, n_slices, hwf, need_mask):
    """Accumulate per-(folded-)channel lane-partial sums for one N-block.

    x_ref:    VMEM (Nb, CF, T)   current tile of x
    psum_ref: VMEM (1, CF, LP)   resident accumulator across the lane-tile axis
    """
    t = pl.program_id(1)

    @pl.when(t == 0)
    def _():
        psum_ref[...] = jnp.zeros_like(psum_ref)

    if need_mask:
        base = t * t_tile
        lane = lax.broadcasted_iota(jnp.int32, (1, 1, lp), 2)

    def slice_sum(off):
        xs = x_ref[:, :, pl.ds(off, lp)].astype(jnp.float32)
        if need_mask:
            xs = jnp.where(base + off + lane < hwf, xs, 0.0)
        return jnp.sum(xs, axis=0, keepdims=True)      # sum over Nb (VPU adds)

    if n_slices == 1:
        psum_ref[...] += slice_sum(0)
    else:
        @pl.loop(0, n_slices)
        def _(j):
            psum_ref[...] += slice_sum(pl.multiple_of(j * lp, lp))


def _apply_bias_kernel(x_ref, eb_ref, y_ref):
    """y = x + eff_bias (per folded channel), computed in fp32 then downcast."""
    y_ref[...] = (x_ref[...].astype(jnp.float32) + eb_ref[...]).astype(y_ref.dtype)


@functools.partial(jax.jit, static_argnames=("threshold",))
def add_bias_forward(x_nchw, bias, init_mean, count, threshold):
    """Functional AddBias forward. Returns (y, new_init_mean, new_count)."""
    N, C, H, W = x_nchw.shape
    HW = H * W
    M = N * HW
    dtype = x_nchw.dtype
    itemsize = jnp.dtype(dtype).itemsize

    tile_bytes, vmem_limit = _hw_budgets()

    F = _choose_fold(C, HW, itemsize)
    CF, HWF = C * F, HW // F
    T = _choose_lane_tile(CF, HWF, itemsize, tile_bytes)
    LP = min(T, 128)
    NB = _choose_batch_tile(N, CF, T, itemsize, tile_bytes)
    NG = N // NB
    grid = (NG, pl.cdiv(HWF, T))
    need_mask = (HWF % T) != 0

    # Free reshape: NCHW -> (N, C*F, HW/F). Channel c occupies rows [c*F, (c+1)*F).
    x_view = x_nchw.reshape(N, CF, HWF)

    bias_c = bias.reshape(C).astype(jnp.float32)
    mean_c = init_mean.reshape(C).astype(jnp.float32)
    count_i = jnp.asarray(count, jnp.int32)
    warm = count_i < threshold

    x_spec = pl.BlockSpec((NB, CF, T), lambda n, t: (n, 0, t))

    def _reduce_mean(xv):
        psum = pl.pallas_call(
            functools.partial(_channel_sum_kernel, t_tile=T, lp=LP,
                              n_slices=T // LP, hwf=HWF, need_mask=need_mask),
            grid=grid,
            in_specs=[x_spec],
            out_specs=pl.BlockSpec((1, CF, LP), lambda n, t: (n, 0, 0)),
            out_shape=jax.ShapeDtypeStruct((NG, CF, LP), jnp.float32),
            compiler_params=pltpu.CompilerParams(
                dimension_semantics=("parallel", "arbitrary"),
                vmem_limit_bytes=vmem_limit),
        )(xv)
        # Single tiny reduce over (N-blocks, fold, lane-partials) outside the kernel.
        return psum.reshape(NG, C, F, LP).sum(axis=(0, 2, 3)) / jnp.float32(M)

    # Running-mean update only during warmup; steady state skips the extra read of x.
    new_mean_c = lax.cond(
        warm,
        lambda xv: mean_c + (_reduce_mean(xv) - mean_c)
        / (count_i + 1).astype(jnp.float32),
        lambda xv: mean_c,
        x_view)

    # Warm branch uses the *updated* running mean (matches in-place PyTorch update).
    eff_bias_c = jnp.where(warm, bias_c * 0.01 - new_mean_c, bias_c - mean_c)
    eff_bias = jnp.repeat(eff_bias_c, F).reshape(1, CF, 1)   # one fp32 value per folded row

    # TODO(synk): optional input_output_aliases={0:0} variant for callers that donate x.
    y_view = pl.pallas_call(
        _apply_bias_kernel,
        grid=grid,
        in_specs=[x_spec,
                  pl.BlockSpec((1, CF, 1), lambda n, t: (0, 0, 0))],
        out_specs=x_spec,
        out_shape=jax.ShapeDtypeStruct((N, CF, HWF), dtype),
        compiler_params=pltpu.CompilerParams(
            dimension_semantics=("parallel", "parallel"),
            vmem_limit_bytes=vmem_limit),
    )(x_view, eff_bias)

    y = y_view.reshape(N, C, H, W)
    new_count = count_i + warm.astype(jnp.int32)
    new_mean = new_mean_c.reshape(init_mean.shape).astype(init_mean.dtype)
    return y, new_mean, new_count


def _ref_forward(x, bias, init_mean, count, threshold):
    """Pure-JAX reference of the PyTorch forward (NCHW)."""
    warm = count < threshold
    mu = jnp.mean(x, axis=(0, 2, 3), keepdims=True)
    new_mean = jnp.where(warm, init_mean + (mu - init_mean) / (count + 1),
                         init_mean)
    eff = jnp.where(warm, bias * 0.01 - new_mean, bias - init_mean)
    return x + eff, new_mean, count + warm.astype(jnp.int32)


if __name__ == "__main__":
    N, C, H, W = 2, 4, 16, 16
    threshold = 8

    key = jax.random.PRNGKey(0)
    kx, kb = jax.random.split(key)
    x0 = jax.random.normal(kx, (N, C, H, W), jnp.float32)

    bias = 0.1 * jax.random.normal(kb, (1, C, 1, 1), jnp.float32)   # _bias
    init_mean = jnp.zeros((1, C, 1, 1), jnp.float32)                # init_mean buffer
    count0 = jnp.array(0, jnp.int32)                                # count buffer

    mean_k, count_k = init_mean, count0       # kernel state
    mean_r, count_r = init_mean, count0       # reference state

    # Run past the warmup threshold to exercise both branches.
    for step in range(threshold + 2):
        xi = x0 + 0.01 * step
        y_k, mean_k, count_k = add_bias_forward(xi, bias, mean_k, count_k,
                                                threshold)
        y_r, mean_r, count_r = _ref_forward(xi, bias, mean_r, count_r,
                                            threshold)
        assert jnp.allclose(y_k, y_r, atol=1e-5), f"y mismatch at step {step}"
        assert jnp.allclose(mean_k, mean_r, atol=1e-5), f"mean mismatch {step}"
        assert int(count_k) == int(count_r), f"count mismatch at step {step}"

    jax.block_until_ready((y_k, mean_k, count_k))
    print("KERNEL_OK")
</pallas_src>

<mosaic_0001>
module attributes {stable_mosaic.version = 11 : i64} {
  func.func @_channel_sum_kernel(%arg0: i32, %arg1: i32, %arg2: memref<2x8x128xf32, #tpu.memory_space<vmem>>, %arg3: memref<1x8x128xf32, #tpu.memory_space<vmem>>) attributes {dimension_semantics = [#tpu.dimension_semantics<parallel>, #tpu.dimension_semantics<arbitrary>], iteration_bounds = array<i64: 1, 1>, scalar_prefetch = 0 : i64, scratch_operands = 0 : i64, tpu.core_type = #tpu.core_type<tc>, window_params = [{transform_indices = @transform_0, window_bounds = array<i64: 2, 8, 128>}, {transform_indices = @transform_1, window_bounds = array<i64: 1, 8, 128>}]} {
    %c0_i32 = arith.constant 0 : i32
    %0 = arith.cmpi eq, %arg1, %c0_i32 : i32
    %1 = arith.extui %0 : i1 to i32
    %c0_i32_0 = arith.constant 0 : i32
    %2 = arith.cmpi ne, %1, %c0_i32_0 : i32
    scf.if %2 {
      %cst_9 = arith.constant 0.000000e+00 : f32
      %9 = vector.broadcast %cst_9 : f32 to vector<1x8x128xf32>
      %c0_10 = arith.constant 0 : index
      %c0_11 = arith.constant 0 : index
      %c0_12 = arith.constant 0 : index
      %10 = vector.load %arg3[%c0_10, %c0_11, %c0_12] : memref<1x8x128xf32, #tpu.memory_space<vmem>>, vector<1x8x128xf32>
      tpu.vector_store %arg3[%c0_10, %c0_11, %c0_12], %9 {strides = array<i32>} : memref<1x8x128xf32, #tpu.memory_space<vmem>>, vector<1x8x128xf32>,
    } else {
    }
    %c0 = arith.constant 0 : index
    %c0_1 = arith.constant 0 : index
    %c0_2 = arith.constant 0 : index
    %3 = vector.load %arg3[%c0, %c0_1, %c0_2] : memref<1x8x128xf32, #tpu.memory_space<vmem>>, vector<1x8x128xf32>
    %c0_3 = arith.constant 0 : index
    %c0_4 = arith.constant 0 : index
    %c0_5 = arith.constant 0 : index
    %4 = vector.load %arg2[%c0_3, %c0_4, %c0_5] : memref<2x8x128xf32, #tpu.memory_space<vmem>>, vector<2x8x128xf32>
    %cst = arith.constant dense<0.000000e+00> : vector<8x128xf32>
    %5 = vector.multi_reduction <add>, %4, %cst [0] : vector<2x8x128xf32> to vector<8x128xf32>
    %6 = vector.shape_cast %5 : vector<8x128xf32> to vector<1x8x128xf32>
    %7 = arith.addf %3, %6 : vector<1x8x128xf32>
    %c0_6 = arith.constant 0 : index
    %c0_7 = arith.constant 0 : index
    %c0_8 = arith.constant 0 : index
    %8 = vector.load %arg3[%c0_6, %c0_7, %c0_8] : memref<1x8x128xf32, #tpu.memory_space<vmem>>, vector<1x8x128xf32>
    tpu.vector_store %arg3[%c0_6, %c0_7, %c0_8], %7 {strides = array<i32>} : memref<1x8x128xf32, #tpu.memory_space<vmem>>, vector<1x8x128xf32>,
    return
  }
  func.func @transform_0(%arg0: i32, %arg1: i32) -> (i32, i32, i32) {
    %c0_i32 = arith.constant 0 : i32
    %c0_i32_0 = arith.constant 0 : i32
    return %arg0, %c0_i32, %arg1 : i32, i32, i32
  }
  func.func @transform_1(%arg0: i32, %arg1: i32) -> (i32, i32, i32) {
    %c0_i32 = arith.constant 0 : i32
    %c0_i32_0 = arith.constant 0 : i32
    %c0_i32_1 = arith.constant 0 : i32
    return %arg0, %c0_i32, %c0_i32_0 : i32, i32, i32
  }
}

module attributes {stable_mosaic.version = 11 : i64} {
  func.func @_apply_bias_kernel(%arg0: i32, %arg1: i32, %arg2: memref<2x8x128xf32, #tpu.memory_space<vmem>>, %arg3: memref<1x8x1xf32, #tpu.memory_space<vmem>>, %arg4: memref<2x8x128xf32, #tpu.memory_space<vmem>>) attributes {dimension_semantics = [#tpu.dimension_semantics<parallel>, #tpu.dimension_semantics<parallel>], iteration_bounds = array<i64: 1, 1>, scalar_prefetch = 0 : i64, scratch_operands = 0 : i64, tpu.core_type = #tpu.core_type<tc>, window_params = [{transform_indices = @transform_0, window_bounds = array<i64: 2, 8, 128>}, {pipeline_mode = #tpu.pipeline_mode<synchronous>, transform_indices = @transform_1, window_bounds = array<i64: 1, 8, 1>}, {transform_indices = @transform_2, window_bounds = array<i64: 2, 8, 128>}]} {
    %c0 = arith.constant 0 : index
    %c0_0 = arith.constant 0 : index
    %c0_1 = arith.constant 0 : index
    %0 = vector.load %arg2[%c0, %c0_0, %c0_1] : memref<2x8x128xf32, #tpu.memory_space<vmem>>, vector<2x8x128xf32>
    %c0_2 = arith.constant 0 : index
    %c0_3 = arith.constant 0 : index
    %c0_4 = arith.constant 0 : index
    %1 = vector.load %arg3[%c0_2, %c0_3, %c0_4] : memref<1x8x1xf32, #tpu.memory_space<vmem>>, vector<1x8x1xf32>
    %2 = vector.broadcast %1 : vector<1x8x1xf32> to vector<2x8x128xf32>
    %3 = arith.addf %0, %2 : vector<2x8x128xf32>
    %c0_5 = arith.constant 0 : index
    %c0_6 = arith.constant 0 : index
    %c0_7 = arith.constant 0 : index
    %4 = vector.load %arg4[%c0_5, %c0_6, %c0_7] : memref<2x8x128xf32, #tpu.memory_space<vmem>>, vector<2x8x128xf32>
    tpu.vector_store %arg4[%c0_5, %c0_6, %c0_7], %3 {strides = array<i32>} : memref<2x8x128xf32, #tpu.memory_space<vmem>>, vector<2x8x128xf32>,
    return
  }
  func.func @transform_0(%arg0: i32, %arg1: i32) -> (i32, i32, i32) {
    %c0_i32 = arith.constant 0 : i32
    %c0_i32_0 = arith.constant 0 : i32
    return %arg0, %c0_i32, %arg1 : i32, i32, i32
  }
  func.func @transform_1(%arg0: i32, %arg1: i32) -> (i32, i32, i32) {
    %c0_i32 = arith.constant 0 : i32
    %c0_i32_0 = arith.constant 0 : i32
    %c0_i32_1 = arith.constant 0 : i32
    %c0_i32_2 = arith.constant 0 : i32
    return %c0_i32, %c0_i32_0, %c0_i32_1 : i32, i32, i32
  }
  func.func @transform_2(%arg0: i32, %arg1: i32) -> (i32, i32, i32) {
    %c0_i32 = arith.constant 0 : i32
    %c0_i32_0 = arith.constant 0 : i32
    return %arg0, %c0_i32, %arg1 : i32, i32, i32
  }
}

</mosaic_0001>

<llo_original>
// kernel: branch_1_fun.1
$region0: #{branch_1_fun.1}
  #allocation0 [shape = 'u32[]', space=smem, size = 0x4, offset = 0x4, fixed_abs, tag = 'smem constant byte address 0x4 - core index']
  #allocation1 [shape = 'u32[144,128]{1,0:T(1,128)}', space=vmem, size = 0x12000, scoped, tag = 'internal scratch']
  %s0 = inlined_call_operand.vmem [shape: f32[2,8,128], index: 0, kind: input, shape index: {}]
  %s1 = inlined_call_operand.vmem [shape: f32[1,8,128], index: 1, kind: output, shape index: {}]
  %s2 = sld [smem:[#allocation0]]
  $region18: #{branch_1_fun.1} parent=0
    _
  %s4 = ssub.s32 1, %s2
  %s5 = scalar_select 0, %s4, %s2
  // Predicated region
  $region2: #{branch_1_fun.1} parent=0 // pred_check
    _
  $region3: #{branch_1_fun.1} parent=0 // pred_check_branch
    %7 = sbr.rel (0) target = $region5
  $region4: #{branch_1_fun.1} parent=0 // pred_region
    _
  $region5: #{branch_1_fun.1} parent=0 // pred_fallthru
    _
  %p8 = scmp.eq.s32.totalorder 0, 0
  // Predicated region
  $region6: #{branch_1_fun.1} parent=0 // pred_check
    %p9 = pneg %p8
  $region7: #{branch_1_fun.1} parent=0 // pred_check_branch
    %11 = sbr.rel (%p9) target = $region9
  $region8: #{branch_1_fun.1} parent=0 // pred_region
    %12 = vst [vmem:[%s1] sm:$0xff] 0.0
  $region9: #{branch_1_fun.1} parent=0 // pred_fallthru
    _
  %v13 = vld [vmem:[%s1] sm:$0xff]
  %v14 = vld [vmem:[%s0] sm:$0xff]
  %v15 = vld [vmem:[%s0 + $0x8] sm:$0xff]
  %v16 = vadd.f32 %v14, %v15
  %v17 = vadd.f32 %v13, %v16
  %18 = vst [vmem:[%s1] sm:$0xff] %v17
  // Predicated region
  $region10: #{branch_1_fun.1} parent=0 // pred_check
    _
  $region11: #{branch_1_fun.1} parent=0 // pred_check_branch
    %20 = sbr.rel (0) target = $region13
  $region12: #{branch_1_fun.1} parent=0 // pred_region
    _
  $region13: #{branch_1_fun.1} parent=0 // pred_fallthru
    _
  // Predicated region
  $region14: #{branch_1_fun.1} parent=0 // pred_check
    _
  $region15: #{branch_1_fun.1} parent=0 // pred_check_branch
    %22 = sbr.rel (0) target = $region17
  $region16: #{branch_1_fun.1} parent=0 // pred_region
    _
  $region17: #{branch_1_fun.1} parent=0 // pred_fallthru
    _

</llo_original>
